<compile_context>
chip_gen: v7x
topology: tpu7x:2x2x1
jax: 0.10.0
libtpu: 0.0.40
codegen_flags: <defaults>
</compile_context>

<pallas_src>
import functools

import jax
import jax.numpy as jnp
import numpy as np
from jax.experimental import pallas as pl
from jax.experimental.pallas import tpu as pltpu


def _focal_kernel(x_ref, tgt_ref, alpha_ref, out_ref, *,
                  gamma, smooth, eps, hw, tile, n_inner, needs_mask):
    """One (C, T) logits block: lanes = spatial positions, sublanes = classes."""
    jo = pl.program_id(1)
    ji = pl.program_id(2)
    g = jo * n_inner + ji                       # global spatial-tile index

    @pl.when(ji == 0)
    def _():
        out_ref[...] = jnp.zeros_like(out_ref)

    x = x_ref[...].astype(jnp.float32)          # (C, T)
    tgt = tgt_ref[...]                          # (1, T) int32
    alpha = alpha_ref[...]                      # (C, 1)

    # softmax over classes (dim=1 of NCHW) without materializing e / sum(e)
    m = jnp.max(x, axis=0, keepdims=True)       # (1, T)
    e = jnp.exp(x - m)                          # (C, T)
    se = jnp.sum(e, axis=0, keepdims=True)      # (1, T)

    row = jax.lax.broadcasted_iota(jnp.int32, x.shape, 0)     # class id / sublane
    one_hot = (row == tgt).astype(jnp.float32)                # (C, T)

    key = one_hot
    if smooth:  # mirrors `if self.smooth:` (falsy for None / 0.0)
        key = jnp.clip(one_hot, smooth, 1.0 - smooth)

    # NOTE: for very large C (>=128) these sublane reductions could be pushed to
    # the MXU via jnp.dot with a ones/alpha row; irrelevant for small C.
    ke = jnp.sum(key * e, axis=0, keepdims=True)               # (1, T)
    pt = ke / se + eps                                         # (1, T)
    logpt = jnp.log(pt)
    gf = float(gamma)
    if gf == 2.0:
        omp = 1.0 - pt
        mod = omp * omp
    elif gf == 1.0:
        mod = 1.0 - pt
    elif gf == 0.0:
        mod = jnp.ones_like(pt)
    else:
        # clamp: eps is added after the divide, so 1-pt can be ~ -1e-10
        mod = jnp.power(jnp.maximum(1.0 - pt, 0.0), gf)
    focal = -mod * logpt                                       # (1, T)

    # alpha[target] gather via the (unsmoothed) one-hot
    a = jnp.sum(one_hot * alpha, axis=0, keepdims=True)        # (1, T)

    contrib = jnp.concatenate([focal, a], axis=0)              # (2, T)

    if needs_mask:
        n_full = hw // tile          # tiles with index < n_full are fully valid

        @pl.when(g < n_full)
        def _():
            out_ref[...] += contrib

        @pl.when(g >= n_full)
        def _():
            # ragged last tile / duplicate padded tile: select (not multiply)
            # so NaN/Inf from out-of-range lanes cannot poison the accumulator.
            col = jax.lax.broadcasted_iota(jnp.int32, contrib.shape, 1) + g * tile
            out_ref[...] += jnp.where(col < hw, contrib, 0.0)
    else:
        out_ref[...] += contrib


class MultiFocalLoss:
    """JAX/Pallas re-implementation of the PyTorch MultiFocalLoss forward."""

    def __init__(self, num_class, alpha=None, gamma=2, balance_index=-1,
                 smooth=None, size_average=True):
        self.num_class = num_class
        self.gamma = float(gamma)
        self.smooth = smooth
        self.size_average = size_average
        if alpha is None:
            a = np.ones((num_class,), np.float32)
        elif isinstance(alpha, (list, np.ndarray)):
            assert len(alpha) == num_class
            a = np.asarray(alpha, np.float32)
            a = a / a.sum()
        elif isinstance(alpha, float):
            a = np.ones((num_class,), np.float32) * (1.0 - alpha)
            a[balance_index] = alpha
        else:
            raise TypeError('Not support alpha type')
        if self.smooth is not None:
            if self.smooth < 0 or self.smooth > 1.0:
                raise ValueError('smooth value should be in [0,1]')
        # class axis on sublanes -> keep alpha as (C, 1)
        self.alpha = jnp.asarray(a, jnp.float32).reshape(num_class, 1)

    @staticmethod
    def _pick_tile(hw, c):
        """Lane tile T sized by a generation-aware VMEM byte budget.

        Footprint estimate per lane: 2 double-buffered (C,) f32 input columns,
        ~8 Mosaic-materialized (C,) f32 temporaries (cast, e, one_hot, key*e,
        alpha-bcast, ...), the double-buffered int32 target column, and the
        resident (2,) f32 accumulator + a dozen (1,T)-class temporaries.
        """
        try:
            info = pltpu.get_tpu_info()
            phys = int(getattr(info, "vmem_capacity_bytes", 64 * 1024 * 1024))
        except Exception:
            phys = 64 * 1024 * 1024                     # conservative (v7x)
        if phys >= 100 * 1024 * 1024:                   # v5e / v6e: 128 MiB VMEM
            budget = 56 * 1024 * 1024
            vmem_limit = 80 * 1024 * 1024
        else:                                           # v7x: 64 MiB VMEM
            budget = 26 * 1024 * 1024
            vmem_limit = 40 * 1024 * 1024
        bytes_per_lane = 40 * max(c, 1) + 64
        t = budget // bytes_per_lane
        t = max(128, (t // 128) * 128)                  # multiple of 128 lanes
        if hw <= t:
            return hw, vmem_limit                       # one full-extent block
        return t, vmem_limit

    def __call__(self, x, target):
        B, C, H, W = x.shape
        assert C == self.num_class
        HW = H * W
        N = B * HW

        # NCHW -> (B, C, H*W): contiguous reshape, no transpose / pad.
        xr = x.reshape(B, C, HW)
        tr = target.reshape(B, 1, HW)
        if tr.dtype != jnp.int32:
            tr = tr.astype(jnp.int32)

        T, vmem_limit = self._pick_tile(HW, C)
        n_t = pl.cdiv(HW, T)
        # Second "parallel" spatial axis so v7x's two TensorCores are fed when B
        # alone can't (B == 1 / odd).  No effect on single-TC v5e/v6e.
        n_outer = 2 if (B % 2 == 1 and n_t >= 2) else 1
        n_inner = pl.cdiv(n_t, n_outer)
        needs_mask = (HW % T != 0) or (n_outer * n_inner != n_t)

        kernel = functools.partial(
            _focal_kernel, gamma=self.gamma, smooth=self.smooth, eps=1e-10,
            hw=HW, tile=T, n_inner=n_inner, needs_mask=needs_mask)

        last_tile = n_t - 1

        def x_map(b, jo, ji):
            g = jnp.minimum(jo * n_inner + ji, last_tile)   # clamp padded tiles
            return (b, 0, g)

        def t_map(b, jo, ji):
            g = jnp.minimum(jo * n_inner + ji, last_tile)
            return (b, 0, g)

        cost = pl.CostEstimate(
            flops=int(12 * N * C),
            transcendentals=int(N * (C + 1)),
            bytes_accessed=int(B * C * HW * xr.dtype.itemsize      # logits
                               + N * 4                              # targets
                               + B * n_outer * 2 * T * 4            # partials
                               + C * 4),                            # alpha
        )

        out = pl.pallas_call(
            kernel,
            out_shape=jax.ShapeDtypeStruct((B, n_outer, 2, T), jnp.float32),
            grid_spec=pltpu.PrefetchScalarGridSpec(
                num_scalar_prefetch=0,
                grid=(B, n_outer, n_inner),
                in_specs=[
                    pl.BlockSpec((None, C, T), x_map),               # logits
                    pl.BlockSpec((None, 1, T), t_map),               # targets
                    pl.BlockSpec((C, 1), lambda b, jo, ji: (0, 0)),  # alpha
                ],
                out_specs=pl.BlockSpec((None, None, 2, T),
                                       lambda b, jo, ji: (b, jo, 0, 0)),
            ),
            compiler_params=pltpu.CompilerParams(
                dimension_semantics=("parallel", "parallel", "arbitrary"),
                vmem_limit_bytes=vmem_limit),
            cost_estimate=cost,
        )(xr, tr, self.alpha)

        sum_f = jnp.sum(out[:, :, 0, :])   # focal partial sums
        sum_a = jnp.sum(out[:, :, 1, :])   # alpha-gather partial sums
        nf = jnp.float32(N)
        if self.size_average:
            # mean over the (N,1,N) broadcasted loss tensor of the PyTorch ref
            return (sum_a / nf) * (sum_f / nf)
        # sum over the (N,1,N) broadcasted loss tensor
        return sum_a * sum_f


def _reference_loss(x, target, alpha, gamma, smooth, size_average):
    """Pure-JAX replica of the PyTorch forward (for sanity checking)."""
    B, C, H, W = x.shape
    logit = jax.nn.softmax(x.astype(jnp.float32), axis=1)
    logit = jnp.transpose(logit, (0, 2, 3, 1)).reshape(-1, C)
    tgt = target.reshape(-1).astype(jnp.int32)
    one_hot = jax.nn.one_hot(tgt, C, dtype=jnp.float32)
    key = jnp.clip(one_hot, smooth, 1.0 - smooth) if smooth else one_hot
    pt = jnp.sum(key * logit, axis=1) + 1e-10
    logpt = jnp.log(pt)
    focal = -jnp.power(1.0 - pt, gamma) * logpt
    a = alpha.reshape(-1)[tgt]
    if size_average:
        return jnp.mean(a) * jnp.mean(focal)
    return jnp.sum(a) * jnp.sum(focal)


if __name__ == "__main__":
    B, C, H, W = 2, 4, 16, 16
    key = jax.random.PRNGKey(0)
    kx, kt = jax.random.split(key)
    x = jax.random.normal(kx, (B, C, H, W), dtype=jnp.float32)
    target = jax.random.randint(kt, (B, H, W), 0, C, dtype=jnp.int32)

    loss_mod = MultiFocalLoss(num_class=C, alpha=None, gamma=2,
                              smooth=None, size_average=True)
    loss = loss_mod(x, target)
    loss = jax.block_until_ready(loss)

    ref = _reference_loss(x, target, loss_mod.alpha, loss_mod.gamma,
                          loss_mod.smooth, loss_mod.size_average)
    np.testing.assert_allclose(np.asarray(loss), np.asarray(ref),
                               rtol=1e-5, atol=1e-6)
    print("KERNEL_OK")
</pallas_src>

<mosaic_0001>
module attributes {stable_mosaic.version = 11 : i64} {
  func.func @_focal_kernel(%arg0: i32, %arg1: i32, %arg2: i32, %arg3: memref<1x4x256xf32, #tpu.memory_space<vmem>>, %arg4: memref<1x1x256xi32, #tpu.memory_space<vmem>>, %arg5: memref<4x1xf32, #tpu.memory_space<vmem>>, %arg6: memref<1x1x2x256xf32, #tpu.memory_space<vmem>>) attributes {dimension_semantics = [#tpu.dimension_semantics<parallel>, #tpu.dimension_semantics<parallel>, #tpu.dimension_semantics<arbitrary>], iteration_bounds = array<i64: 2, 1, 1>, scalar_prefetch = 0 : i64, scratch_operands = 0 : i64, tpu.core_type = #tpu.core_type<tc>, window_params = [{transform_indices = @transform_0, window_bounds = array<i64: 1, 4, 256>}, {transform_indices = @transform_1, window_bounds = array<i64: 1, 1, 256>}, {pipeline_mode = #tpu.pipeline_mode<synchronous>, transform_indices = @transform_2, window_bounds = array<i64: 4, 1>}, {transform_indices = @transform_3, window_bounds = array<i64: 1, 1, 2, 256>}]} {
    %c0_i32 = arith.constant 0 : i32
    %0 = arith.cmpi eq, %arg2, %c0_i32 : i32
    %1 = arith.extui %0 : i1 to i32
    %c0_i32_0 = arith.constant 0 : i32
    %2 = arith.cmpi ne, %1, %c0_i32_0 : i32
    scf.if %2 {
      %cst_22 = arith.constant 0.000000e+00 : f32
      %44 = vector.broadcast %cst_22 : f32 to vector<2x256xf32>
      %c0_23 = arith.constant 0 : index
      %c0_24 = arith.constant 0 : index
      %c0_25 = arith.constant 0 : index
      %c0_26 = arith.constant 0 : index
      %45 = vector.load %arg6[%c0_23, %c0_24, %c0_25, %c0_26] : memref<1x1x2x256xf32, #tpu.memory_space<vmem>>, vector<1x1x2x256xf32>
      %46 = vector.shape_cast %45 : vector<1x1x2x256xf32> to vector<2x256xf32>
      %47 = vector.shape_cast %44 : vector<2x256xf32> to vector<1x1x2x256xf32>
      tpu.vector_store %arg6[%c0_23, %c0_24, %c0_25, %c0_26], %47 {strides = array<i32>} : memref<1x1x2x256xf32, #tpu.memory_space<vmem>>, vector<1x1x2x256xf32>,
    } else {
    }
    %c0 = arith.constant 0 : index
    %c0_1 = arith.constant 0 : index
    %c0_2 = arith.constant 0 : index
    %3 = vector.load %arg3[%c0, %c0_1, %c0_2] : memref<1x4x256xf32, #tpu.memory_space<vmem>>, vector<1x4x256xf32>
    %4 = vector.shape_cast %3 : vector<1x4x256xf32> to vector<4x256xf32>
    %c0_3 = arith.constant 0 : index
    %c0_4 = arith.constant 0 : index
    %c0_5 = arith.constant 0 : index
    %5 = vector.load %arg4[%c0_3, %c0_4, %c0_5] : memref<1x1x256xi32, #tpu.memory_space<vmem>>, vector<1x1x256xi32>
    %6 = vector.shape_cast %5 : vector<1x1x256xi32> to vector<1x256xi32>
    %c0_6 = arith.constant 0 : index
    %c0_7 = arith.constant 0 : index
    %7 = vector.load %arg5[%c0_6, %c0_7] : memref<4x1xf32, #tpu.memory_space<vmem>>, vector<4x1xf32>
    %cst = arith.constant dense<0xFF800000> : vector<256xf32>
    %8 = vector.multi_reduction <maximumf>, %4, %cst [0] : vector<4x256xf32> to vector<256xf32>
    %9 = vector.shape_cast %8 : vector<256xf32> to vector<1x256xf32>
    %10 = vector.broadcast %9 : vector<1x256xf32> to vector<4x256xf32>
    %11 = arith.subf %4, %10 : vector<4x256xf32>
    %12 = math.exp %11 : vector<4x256xf32>
    %cst_8 = arith.constant dense<0.000000e+00> : vector<256xf32>
    %13 = vector.multi_reduction <add>, %12, %cst_8 [0] : vector<4x256xf32> to vector<256xf32>
    %14 = vector.shape_cast %13 : vector<256xf32> to vector<1x256xf32>
    %15 = tpu.iota {dimensions = array<i32: 0>} : vector<4x256xi32>
    %16 = vector.broadcast %6 : vector<1x256xi32> to vector<4x256xi32>
    %17 = arith.cmpi eq, %15, %16 : vector<4x256xi32>
    %18 = arith.extui %17 : vector<4x256xi1> to vector<4x256xi32>
    %19 = arith.sitofp %18 : vector<4x256xi32> to vector<4x256xf32>
    %20 = arith.mulf %19, %12 : vector<4x256xf32>
    %cst_9 = arith.constant dense<0.000000e+00> : vector<256xf32>
    %21 = vector.multi_reduction <add>, %20, %cst_9 [0] : vector<4x256xf32> to vector<256xf32>
    %22 = vector.shape_cast %21 : vector<256xf32> to vector<1x256xf32>
    %23 = arith.divf %22, %14 : vector<1x256xf32>
    %cst_10 = arith.constant 1.000000e-10 : f32
    %24 = vector.broadcast %cst_10 : f32 to vector<1x256xf32>
    %25 = arith.addf %23, %24 : vector<1x256xf32>
    %26 = math.log %25 : vector<1x256xf32>
    %cst_11 = arith.constant 1.000000e+00 : f32
    %27 = vector.broadcast %cst_11 : f32 to vector<1x256xf32>
    %28 = arith.subf %27, %25 : vector<1x256xf32>
    %29 = arith.mulf %28, %28 : vector<1x256xf32>
    %cst_12 = arith.constant 0.000000e+00 : f32
    %30 = vector.broadcast %cst_12 : f32 to vector<1x256xf32>
    %31 = arith.subf %30, %29 : vector<1x256xf32>
    %32 = arith.mulf %31, %26 : vector<1x256xf32>
    %33 = vector.broadcast %7 : vector<4x1xf32> to vector<4x256xf32>
    %34 = arith.mulf %19, %33 : vector<4x256xf32>
    %cst_13 = arith.constant dense<0.000000e+00> : vector<256xf32>
    %35 = vector.multi_reduction <add>, %34, %cst_13 [0] : vector<4x256xf32> to vector<256xf32>
    %36 = vector.shape_cast %35 : vector<256xf32> to vector<1x256xf32>
    %37 = tpu.concatenate %32, %36 in 0 : vector<1x256xf32>, vector<1x256xf32> -> vector<2x256xf32>
    %c0_14 = arith.constant 0 : index
    %c0_15 = arith.constant 0 : index
    %c0_16 = arith.constant 0 : index
    %c0_17 = arith.constant 0 : index
    %38 = vector.load %arg6[%c0_14, %c0_15, %c0_16, %c0_17] : memref<1x1x2x256xf32, #tpu.memory_space<vmem>>, vector<1x1x2x256xf32>
    %39 = vector.shape_cast %38 : vector<1x1x2x256xf32> to vector<2x256xf32>
    %40 = arith.addf %39, %37 : vector<2x256xf32>
    %c0_18 = arith.constant 0 : index
    %c0_19 = arith.constant 0 : index
    %c0_20 = arith.constant 0 : index
    %c0_21 = arith.constant 0 : index
    %41 = vector.load %arg6[%c0_18, %c0_19, %c0_20, %c0_21] : memref<1x1x2x256xf32, #tpu.memory_space<vmem>>, vector<1x1x2x256xf32>
    %42 = vector.shape_cast %41 : vector<1x1x2x256xf32> to vector<2x256xf32>
    %43 = vector.shape_cast %40 : vector<2x256xf32> to vector<1x1x2x256xf32>
    tpu.vector_store %arg6[%c0_18, %c0_19, %c0_20, %c0_21], %43 {strides = array<i32>} : memref<1x1x2x256xf32, #tpu.memory_space<vmem>>, vector<1x1x2x256xf32>,
    return
  }
  func.func @transform_0(%arg0: i32, %arg1: i32, %arg2: i32) -> (i32, i32, i32) {
    %c1_i32 = arith.constant 1 : i32
    %0 = arith.muli %arg1, %c1_i32 : i32
    %1 = arith.addi %0, %arg2 : i32
    %c0_i32 = arith.constant 0 : i32
    %2 = arith.minsi %1, %c0_i32 : i32
    %c0_i32_0 = arith.constant 0 : i32
    %c0_i32_1 = arith.constant 0 : i32
    return %arg0, %c0_i32_0, %2 : i32, i32, i32
  }
  func.func @transform_1(%arg0: i32, %arg1: i32, %arg2: i32) -> (i32, i32, i32) {
    %c1_i32 = arith.constant 1 : i32
    %0 = arith.muli %arg1, %c1_i32 : i32
    %1 = arith.addi %0, %arg2 : i32
    %c0_i32 = arith.constant 0 : i32
    %2 = arith.minsi %1, %c0_i32 : i32
    %c0_i32_0 = arith.constant 0 : i32
    %c0_i32_1 = arith.constant 0 : i32
    return %arg0, %c0_i32_0, %2 : i32, i32, i32
  }
  func.func @transform_2(%arg0: i32, %arg1: i32, %arg2: i32) -> (i32, i32) {
    %c0_i32 = arith.constant 0 : i32
    %c0_i32_0 = arith.constant 0 : i32
    %c0_i32_1 = arith.constant 0 : i32
    return %c0_i32, %c0_i32_0 : i32, i32
  }
  func.func @transform_3(%arg0: i32, %arg1: i32, %arg2: i32) -> (i32, i32, i32, i32) {
    %c0_i32 = arith.constant 0 : i32
    %c0_i32_0 = arith.constant 0 : i32
    %c0_i32_1 = arith.constant 0 : i32
    return %arg0, %arg1, %c0_i32, %c0_i32_0 : i32, i32, i32, i32
  }
}

</mosaic_0001>

<llo_original>
// kernel: tpu_custom_call.1
$region0: #{tpu_custom_call.1}
  #allocation0 [shape = 'u32[]', space=smem, size = 0x4, offset = 0x4, fixed_abs, tag = 'smem constant byte address 0x4 - core index']
  #allocation1 [shape = 'u32[144,128]{1,0:T(1,128)}', space=vmem, size = 0x12000, scoped, tag = 'internal scratch']
  %s0 = inlined_call_operand.hbm [shape: f32[2,4,256], index: 0, kind: input, shape index: {}]
  %s1 = inlined_call_operand.vmem [shape: s32[2,1,256], index: 1, kind: input, shape index: {}]
  %s2 = inlined_call_operand.vmem [shape: f32[4,1], index: 2, kind: input, shape index: {}]
  %s3 = inlined_call_operand.hbm [shape: f32[2,1,2,256], index: 3, kind: output, shape index: {}]
  %s4 = sld [smem:[#allocation0]]
  $region53: #{tpu_custom_call.1} parent=0
    _
  %s6 = ssub.s32 1, %s4
  %s7 = scalar_select 0, %s6, %s4
  $region1: #{tpu_custom_call.1} parent=0
    #allocation2 [shape = 'u8[8192]{0}', space=vmem, size = 0x2000, scoped, tag = 'input window, operand 0']
    #allocation3 [shape = 's32[2]{0}', space=sflag, size = 0x8, scoped, tag = 'scoped memory for tpu_custom_call.1']
    #allocation4 [shape = 's32[2]{0}', space=sflag, size = 0x8, scoped, tag = 'scoped memory for tpu_custom_call.1']
    #allocation5 [shape = 'u8[4096]{0}', space=vmem, size = 0x1000, scoped, tag = 'output window, operand 0']
    %8 = vsyncpa [#allocation3], 0
    %s9 = scalar_lea.sflag [#allocation3], 1
    %10 = vsyncpa %s9, 0
    %11 = vsyncpa [#allocation4], 0
    %s12 = scalar_lea.sflag [#allocation4], 1
    %13 = vsyncpa %s12, 0
    loop: start=0, step=1, limit=4
    $region2: #{tpu_custom_call.1} parent=1 // loop_pre_header
      _
    $region3: #{tpu_custom_call.1} parent=1 // loop_header
      %s15 = sphi 0, %s19
      %p16 = scmp.ge.s32.totalorder %s15, 4
      %s22 = sphi 0, %s41
      %s23 = sphi 0, %s37
      %s24 = sphi 0, %s33
      %s25 = sphi 0, %s22
      %s26 = sphi 0, %s23
      %s27 = sphi 0, %s24
      %s28 = sphi 0, %s25
      %s29 = sphi 0, %s26
      %s30 = sphi 0, %s27
      %s52 = sphi 0, %s54
      %s55 = sphi 0, %s52
      %s56 = sphi 0, %s55
      %s72 = sphi 0, %s56
      %s86 = sphi 0, %s88
      %s89 = sphi 0, %s86
      %s90 = sphi 0, %s89
      %s106 = sphi 0, %s90
      %s110 = sphi 0, %s110
      %s112 = sphi 0, %s110
      %s113 = sphi 0, %s112
      %s127 = sphi 0, %s113
      %s135 = sphi 0, %s137
      %s138 = sphi 0, %s135
      %s139 = sphi 0, %s138
      %s155 = sphi 0, %s139
    $region4: #{tpu_custom_call.1} parent=1 // loop_header_branch
      %18 = sbr.rel (%p16) target = $region8
    $region5: #{tpu_custom_call.1} parent=1 // loop_body
      %s20 = ssub.s32 %s15, 1
      %s21 = ssub.s32 %s15, 2
      %s31 = sadd.s32 1, %s24
      %p32 = scmp.ge.s32.totalorder %s31, 1
      %s33 = scalar_select %p32, 0, %s31
      %s34 = sadd.s32 1, %s23
      %s35 = scalar_select %p32, %s34, %s23
      %p36 = scmp.ge.s32.totalorder %s35, 1
      %s37 = scalar_select %p36, 0, %s35
      %s38 = sadd.s32 1, %s22
      %s39 = scalar_select %p36, %s38, %s22
      %p40 = scmp.ge.s32.totalorder %s39, 2
      %s41 = scalar_select %p40, 0, %s39
      %s42 = sadd.s32 %s23, %s24
      %p43 = scmp.lt.s32.totalorder %s42, 0
      %s44 = scalar_select %p43, %s42, 0
      %s45 = sadd.s32 %s37, %s33
      %p46 = scmp.lt.s32.totalorder %s45, 0
      %s47 = scalar_select %p46, %s45, 0
      %s48 = ssub.s32 %s22, %s41
      %s49 = ssub.s32 %s44, %s47
      %s50 = sor.u32 %s48, %s49
      %p51 = scmp.eq.s32.totalorder %s50, 0
      %s53 = sadd.s32 %s52, 1
      %s54 = scalar_select %p51, %s52, %s53
      %p57 = pneg %p51
      %p58 = scmp.eq.s32.totalorder %s15, 1
      %p59 = por %p57, %p58
      %p60 = scmp.ne.s32.totalorder %s52, %s55
      %p61 = scmp.eq.s32.totalorder %s15, 0
      %p62 = por %p60, %p61
      %p63 = scmp.ne.s32.totalorder %s52, %s55
      %p64 = scmp.eq.s32.totalorder %s20, 1
      %p65 = por %p63, %p64
      %p66 = scmp.ne.s32.totalorder %s55, %s56
      %p67 = scmp.eq.s32.totalorder %s20, 0
      %p68 = por %p66, %p67
      %p69 = scmp.ne.s32.totalorder %s55, %s56
      %p70 = scmp.eq.s32.totalorder %s21, 1
      %p71 = por %p69, %p70
      %p73 = scmp.ne.s32.totalorder %s56, %s72
      %p74 = scmp.eq.s32.totalorder %s21, 0
      %p75 = por %p73, %p74
      %s76 = sadd.s32 %s23, %s24
      %p77 = scmp.lt.s32.totalorder %s76, 0
      %s78 = scalar_select %p77, %s76, 0
      %s79 = sadd.s32 %s37, %s33
      %p80 = scmp.lt.s32.totalorder %s79, 0
      %s81 = scalar_select %p80, %s79, 0
      %s82 = ssub.s32 %s22, %s41
      %s83 = ssub.s32 %s78, %s81
      %s84 = sor.u32 %s82, %s83
      %p85 = scmp.eq.s32.totalorder %s84, 0
      %s87 = sadd.s32 %s86, 1
      %s88 = scalar_select %p85, %s86, %s87
      %p91 = pneg %p85
      %p92 = scmp.eq.s32.totalorder %s15, 1
      %p93 = por %p91, %p92
      %p94 = scmp.ne.s32.totalorder %s86, %s89
      %p95 = scmp.eq.s32.totalorder %s15, 0
      %p96 = por %p94, %p95
      %p97 = scmp.ne.s32.totalorder %s86, %s89
      %p98 = scmp.eq.s32.totalorder %s20, 1
      %p99 = por %p97, %p98
      %p100 = scmp.ne.s32.totalorder %s89, %s90
      %p101 = scmp.eq.s32.totalorder %s20, 0
      %p102 = por %p100, %p101
      %p103 = scmp.ne.s32.totalorder %s89, %s90
      %p104 = scmp.eq.s32.totalorder %s21, 1
      %p105 = por %p103, %p104
      %p107 = scmp.ne.s32.totalorder %s90, %s106
      %p108 = scmp.eq.s32.totalorder %s21, 0
      %p109 = por %p107, %p108
      %s111 = sadd.s32 %s110, 1
      %p114 = scmp.eq.s32.totalorder %s15, 1
      %p115 = scmp.ne.s32.totalorder %s110, %s112
      %p116 = scmp.eq.s32.totalorder %s15, 0
      %p117 = por %p115, %p116
      %p118 = scmp.ne.s32.totalorder %s110, %s112
      %p119 = scmp.eq.s32.totalorder %s20, 1
      %p120 = por %p118, %p119
      %p121 = scmp.ne.s32.totalorder %s112, %s113
      %p122 = scmp.eq.s32.totalorder %s20, 0
      %p123 = por %p121, %p122
      %p124 = scmp.ne.s32.totalorder %s112, %s113
      %p125 = scmp.eq.s32.totalorder %s21, 1
      %p126 = por %p124, %p125
      %p128 = scmp.ne.s32.totalorder %s113, %s127
      %p129 = scmp.eq.s32.totalorder %s21, 0
      %p130 = por %p128, %p129
      %s131 = ssub.s32 %s22, %s41
      %s132 = ssub.s32 %s23, %s37
      %s133 = sor.u32 %s131, %s132
      %p134 = scmp.eq.s32.totalorder %s133, 0
      %s136 = sadd.s32 %s135, 1
      %s137 = scalar_select %p134, %s135, %s136
      %p140 = pneg %p134
      %p141 = scmp.eq.s32.totalorder %s15, 1
      %p142 = por %p140, %p141
      %p143 = scmp.ne.s32.totalorder %s135, %s138
      %p144 = scmp.eq.s32.totalorder %s15, 0
      %p145 = por %p143, %p144
      %p146 = scmp.ne.s32.totalorder %s135, %s138
      %p147 = scmp.eq.s32.totalorder %s20, 1
      %p148 = por %p146, %p147
      %p149 = scmp.ne.s32.totalorder %s138, %s139
      %p150 = scmp.eq.s32.totalorder %s20, 0
      %p151 = por %p149, %p150
      %p152 = scmp.ne.s32.totalorder %s138, %s139
      %p153 = scmp.eq.s32.totalorder %s21, 1
      %p154 = por %p152, %p153
      %p156 = scmp.ne.s32.totalorder %s139, %s155
      %p157 = scmp.eq.s32.totalorder %s21, 0
      %p158 = por %p156, %p157
      %p159 = scmp.le.s32.totalorder 1, %s15
      %p160 = scmp.lt.s32.totalorder %s15, 3
      %p161 = pnand %p159, %p160
      %p162 = pneg %p161
      // Predicated region
      $region9: #{tpu_custom_call.1} parent=5 // pred_check
        _
      $region10: #{tpu_custom_call.1} parent=5 // pred_check_branch
        %164 = sbr.rel (%p161) target = $region12
      $region11: #{tpu_custom_call.1} parent=5 // pred_region
        %s165 = ssub.s32 %s15, 1
        // Predicated region
        $region13: #{tpu_custom_call.1} parent=11 // pred_check
          %p166 = pneg %p123
        $region14: #{tpu_custom_call.1} parent=11 // pred_check_branch
          %168 = sbr.rel (%p166) target = $region16
        $region15: #{tpu_custom_call.1} parent=11 // pred_region
          _
        $region16: #{tpu_custom_call.1} parent=11 // pred_fallthru
          _
      $region12: #{tpu_custom_call.1} parent=5 // pred_fallthru
        _
      %p169 = scmp.lt.s32.totalorder %s15, 2
      // Predicated region
      $region17: #{tpu_custom_call.1} parent=5 // pred_check
        %p170 = pneg %p169
      $region18: #{tpu_custom_call.1} parent=5 // pred_check_branch
        %172 = sbr.rel (%p170) target = $region20
      $region19: #{tpu_custom_call.1} parent=5 // pred_region
        // Predicated region
        $region21: #{tpu_custom_call.1} parent=19 // pred_check
          %p173 = pneg %p62
        $region22: #{tpu_custom_call.1} parent=19 // pred_check_branch
          %175 = sbr.rel (%p173) target = $region24
        $region23: #{tpu_custom_call.1} parent=19 // pred_region
          %s176 = sand.u32 %s52, 1
          %s177 = scalar_lea.sflag [#allocation3], %s176
          %s178 = sand.u32 %s52, 1
          %s179 = smul.addr %s178, 8
          %s180 = scalar_lea.vmem [#allocation2], %s179
          %s181 = sadd.s32 %s23, %s24
          %p182 = scmp.lt.s32.totalorder %s181, 0
          %s183 = scalar_select %p182, %s181, 0
          %s184 = smul.u32 2, %s183
          %s186 = ssub.s32 128, 128
          %187 = vsyncadd %s177, %s186
          %s188 = smul.addr %s22, 2
          %s189 = sadd.s32 %s184, %s188
          %s190 = smul.addr %s189, 64
          %s191 = scalar_lea.hbm %s0, %s190
          %s193 = sshll.u32 %s180, 4
          %s194 = int_to_ptr.vmem [resolvable:$true] %s193
          %196 = dma.hbm_to_vmem [thread:$0]  %s191, 128, %s194, %s177
        $region24: #{tpu_custom_call.1} parent=19 // pred_fallthru
          _
        // Predicated region
        $region25: #{tpu_custom_call.1} parent=19 // pred_check
          %p197 = pneg %p96
        $region26: #{tpu_custom_call.1} parent=19 // pred_check_branch
          %199 = sbr.rel (%p197) target = $region28
        $region27: #{tpu_custom_call.1} parent=19 // pred_region
          %s200 = sadd.s32 %s23, %s24
          %p201 = scmp.lt.s32.totalorder %s200, 0
          %s202 = scalar_select %p201, %s200, 0
          %s203 = smul.u32 2, %s202
          %p204 = scmp.lt.s32.totalorder %s22, 1
          %s205 = scalar_select %p204, %s22, 1
          %p206 = scmp.lt.s32.totalorder %s203, 1
          %s207 = scalar_select %p206, %s203, 1
          %s208 = smul.addr %s205, 2
          %s209 = sadd.s32 %s207, %s208
          %s210 = scalar_lea.vmem %s1, %s209
          %s211 = sadd.s32 %s23, %s24
          %p212 = scmp.lt.s32.totalorder %s211, 0
          %s213 = scalar_select %p212, %s211, 0
          %s214 = smul.u32 2, %s213
        $region28: #{tpu_custom_call.1} parent=19 // pred_fallthru
          _
      $region20: #{tpu_custom_call.1} parent=5 // pred_fallthru
        _
      %p215 = scmp.le.s32.totalorder 1, %s15
      %p216 = scmp.lt.s32.totalorder %s15, 3
      %p217 = pnand %p215, %p216
      %p218 = pneg %p217
      // Predicated region
      $region29: #{tpu_custom_call.1} parent=5 // pred_check
        _
      $region30: #{tpu_custom_call.1} parent=5 // pred_check_branch
        %220 = sbr.rel (%p217) target = $region32
      $region31: #{tpu_custom_call.1} parent=5 // pred_region
        %s221 = ssub.s32 %s15, 1
        %s222 = sand.u32 %s55, 1
        %s223 = scalar_lea.sflag [#allocation3], %s222
        %s224 = sand.u32 %s55, 1
        %s225 = smul.addr %s224, 8
        %s226 = scalar_lea.vmem [#allocation2], %s225
        // Predicated region
        $region33: #{tpu_custom_call.1} parent=31 // pred_check
          %p227 = pneg %p68
        $region34: #{tpu_custom_call.1} parent=31 // pred_check_branch
          %229 = sbr.rel (%p227) target = $region36
        $region35: #{tpu_custom_call.1} parent=31 // pred_region
          %230 = dma.done %s223, 128
        $region36: #{tpu_custom_call.1} parent=31 // pred_fallthru
          _
        %s231 = sand.u32 %s55, 1
        %s232 = scalar_lea.sflag [#allocation3], %s231
        %s233 = sand.u32 %s55, 1
        %s234 = smul.addr %s233, 8
        %s235 = scalar_lea.vmem [#allocation2], %s234
        %p236 = pneg %p68
        %p237 = pneg %p65
        %s238 = sadd.s32 %s26, %s27
        %p239 = scmp.lt.s32.totalorder %s238, 0
        %s240 = scalar_select %p239, %s238, 0
        %s241 = smul.u32 2, %s240
        %p242 = scmp.lt.s32.totalorder %s25, 1
        %s243 = scalar_select %p242, %s25, 1
        %p244 = scmp.lt.s32.totalorder %s241, 1
        %s245 = scalar_select %p244, %s241, 1
        %s246 = smul.addr %s243, 2
        %s247 = sadd.s32 %s245, %s246
        %s248 = scalar_lea.vmem %s1, %s247
        %p249 = pneg %p102
        %p250 = pneg %p99
        %p251 = pneg %p123
        %p252 = pneg %p120
        %p253 = pneg %p151
        %p254 = pneg %p148
        %s255 = sand.u32 %s138, 1
        %s256 = scalar_lea.sflag [#allocation4], %s255
        %s257 = sand.u32 %s138, 1
        %s258 = smul.addr %s257, 4
        %s259 = scalar_lea.vmem [#allocation5], %s258
        %s260 = sadd.s32 %s26, %s27
        %p261 = scmp.lt.s32.totalorder %s260, 0
        %s262 = scalar_select %p261, %s260, 0
        %s263 = smul.u32 2, %s262
        %s264 = sadd.s32 %s26, %s27
        %p265 = scmp.lt.s32.totalorder %s264, 0
        %s266 = scalar_select %p265, %s264, 0
        %s267 = smul.u32 2, %s266
        %p268 = scmp.lt.s32.totalorder %s25, 1
        %s269 = scalar_select %p268, %s25, 1
        %p270 = scmp.lt.s32.totalorder %s267, 1
        %s271 = scalar_select %p270, %s267, 1
        %s272 = smul.addr %s269, 2
        %s273 = sadd.s32 %s271, %s272
        %s274 = scalar_lea.vmem %s1, %s273
        %s275 = sadd.s32 %s26, %s27
        %p276 = scmp.lt.s32.totalorder %s275, 0
        %s277 = scalar_select %p276, %s275, 0
        %s278 = smul.u32 2, %s277
        %p279 = scmp.eq.s32.totalorder %s27, 0
        // Predicated region
        $region37: #{tpu_custom_call.1} parent=31 // pred_check
          %p280 = pneg %p279
        $region38: #{tpu_custom_call.1} parent=31 // pred_check_branch
          %282 = sbr.rel (%p280) target = $region40
        $region39: #{tpu_custom_call.1} parent=31 // pred_region
          %283 = vst [vmem:[%s259] sm:$0xf] 0.0
        $region40: #{tpu_custom_call.1} parent=31 // pred_fallthru
          _
        %v284 = vld [vmem:[%s226] sm:$0xff]
        %v285 = vld [vmem:[%s274] sm:$0x3]
        %v286 = vld [vmem:[%s2] sm:$0xf]
        %v288 = vcombine.high %v284, %v284
        %vm290 = vcmask 1043456
        %v291 = vsel %vm290, %v284, -inf
        %v292 = vrot.slane %v291, 4
        %v293 = vmax.f32 %v291, %v292
        %v294 = vrot.slane %v293, 2
        %v295 = vmax.f32 %v293, %v294
        %v296 = vrot.slane %v295, 1
        %v297 = vmax.f32 %v295, %v296
        %v298 = vsel %vm290, %v288, -inf
        %v299 = vrot.slane %v298, 4
        %v300 = vmax.f32 %v298, %v299
        %v301 = vrot.slane %v300, 2
        %v302 = vmax.f32 %v300, %v301
        %v303 = vrot.slane %v302, 1
        %v304 = vmax.f32 %v302, %v303
        %v307 = vcombine.low %v297, %v304
        %v309 = vsub.f32 %v284, %v307
        %v310 = vmul.f32 %v309, 1.442695
        %v311 = vpow.pop %v310
        %v313 = vcombine.high %v311, %v311
        %v315 = vsel %vm290, %v311, 0.0
        %v316 = vrot.slane %v315, 4
        %v317 = vadd.f32 %v315, %v316
        %v318 = vrot.slane %v317, 2
        %v319 = vadd.f32 %v317, %v318
        %v320 = vrot.slane %v319, 1
        %v321 = vadd.f32 %v319, %v320
        %v322 = vsel %vm290, %v313, 0.0
        %v323 = vrot.slane %v322, 4
        %v324 = vadd.f32 %v322, %v323
        %v325 = vrot.slane %v324, 2
        %v326 = vadd.f32 %v324, %v325
        %v327 = vrot.slane %v326, 1
        %v328 = vadd.f32 %v326, %v327
        %v329 = vlaneseq
        %v330 = vshrl.u32 %v329, 7
        %v331 = vlaneseq
        %v332 = vshrl.u32 %v331, 7
        %v333 = vsub.s32 0, %v332
        %v334 = vrot.slane %v285, %v333
        %v335 = vlaneseq
        %v336 = vshrl.u32 %v335, 7
        %v337 = vsub.s32 1, %v336
        %v338 = vrot.slane %v285, %v337
        %vm339 = vcmp.eq.s32.totalorder %v330, %v334
        %vm340 = vcmp.eq.s32.totalorder %v330, %v338
        %v341 = vsel %vm339, 1, 0
        %v342 = vsel %vm340, 1, 0
        %v343 = vcvt.s32.f32 %v341
        %v344 = vcvt.s32.f32 %v342
        %v345 = vmul.f32 %v343, %v311
        %v346 = vmul.f32 %v344, %v313
        %v347 = vsel %vm290, %v345, 0.0
        %v348 = vrot.slane %v347, 4
        %v349 = vadd.f32 %v347, %v348
        %v350 = vrot.slane %v349, 2
        %v351 = vadd.f32 %v349, %v350
        %v352 = vrot.slane %v351, 1
        %v353 = vadd.f32 %v351, %v352
        %v354 = vsel %vm290, %v346, 0.0
        %v355 = vrot.slane %v354, 4
        %v356 = vadd.f32 %v354, %v355
        %v357 = vrot.slane %v356, 2
        %v358 = vadd.f32 %v356, %v357
        %v359 = vrot.slane %v358, 1
        %v360 = vadd.f32 %v358, %v359
        %v361 = vrcp.pop %v321
        %v362 = vmul.f32 %v353, %v361
        %v363 = vrcp.pop %v328
        %v364 = vmul.f32 %v360, %v363
        %v365 = vadd.f32 %v362, 1e-10
        %v366 = vadd.f32 %v364, 1e-10
        %v367 = vlog2.pop %v365
        %v368 = vmul.f32 %v367, 0.6931472
        %v369 = vlog2.pop %v366
        %v370 = vmul.f32 %v369, 0.6931472
        %v371 = vsub.f32 1.0, %v365
        %v372 = vsub.f32 1.0, %v366
        %v373 = vmul.f32 %v371, %v371
        %v374 = vmul.f32 %v372, %v372
        %v375 = vsub.f32 0.0, %v373
        %v376 = vsub.f32 0.0, %v374
        %v377 = vmul.f32 %v375, %v368
        %v378 = vmul.f32 %v376, %v370
        %380 = vset.pattern.permute.xlu0 0
        %381 = vperm.xlu0 %380, %v286
        %v382 = vpop.permute.xlu0 %381
        %v384 = vmul.f32 %v343, %v382
        %v385 = vmul.f32 %v344, %v382
        %v386 = vsel %vm290, %v384, 0.0
        %v387 = vrot.slane %v386, 4
        %v388 = vadd.f32 %v386, %v387
        %v389 = vrot.slane %v388, 2
        %v390 = vadd.f32 %v388, %v389
        %v391 = vrot.slane %v390, 1
        %v392 = vadd.f32 %v390, %v391
        %v393 = vsel %vm290, %v385, 0.0
        %v394 = vrot.slane %v393, 4
        %v395 = vadd.f32 %v393, %v394
        %v396 = vrot.slane %v395, 2
        %v397 = vadd.f32 %v395, %v396
        %v398 = vrot.slane %v397, 1
        %v399 = vadd.f32 %v397, %v398
        %vm400 = vcmask 1040384
        %v401 = vsel %vm400, %v377, %v392
        %v402 = vsel %vm400, %v378, %v399
        %v403 = vld [vmem:[%s259] sm:$0xf]
        %v406 = vcombine.low %v401, %v402
        %v408 = vunpack.c.l.s4 1983009808
        %v409 = vunpack.c.0.s8 %v408
        %v410 = vlaneseq
        %v411 = vshrl.u32 %v410, 7
        %v412 = vsub.s32 %v409, %v411
        %v413 = vrot.slane %v406, %v412
        %v415 = vadd.f32 %v403, %v413
        %416 = vst [vmem:[%s259] sm:$0xf] %v415
        %s417 = sand.u32 %s138, 1
        %s418 = scalar_lea.sflag [#allocation4], %s417
        %s419 = sand.u32 %s138, 1
        %s420 = smul.addr %s419, 4
        %s421 = scalar_lea.vmem [#allocation5], %s420
        // Predicated region
        $region41: #{tpu_custom_call.1} parent=31 // pred_check
          %p422 = pneg %p148
        $region42: #{tpu_custom_call.1} parent=31 // pred_check_branch
          %424 = sbr.rel (%p422) target = $region44
        $region43: #{tpu_custom_call.1} parent=31 // pred_region
          %s426 = ssub.s32 64, 64
          %427 = vsyncadd %s418, %s426
          %s428 = smul.addr %s26, 2
          %s429 = smul.addr %s25, 2
          %s430 = sadd.s32 %s428, %s429
          %s431 = smul.addr %s430, 32
          %s432 = scalar_lea.hbm %s3, %s431
          %s434 = sshll.u32 %s421, 4
          %s435 = int_to_ptr.vmem [resolvable:$true] %s434
          %437 = dma.vmem_to_hbm [thread:$0]  %s435, 64, %s432, %s418
        $region44: #{tpu_custom_call.1} parent=31 // pred_fallthru
          _
      $region32: #{tpu_custom_call.1} parent=5 // pred_fallthru
        _
      %p438 = scmp.le.s32.totalorder 2, %s15
      // Predicated region
      $region45: #{tpu_custom_call.1} parent=5 // pred_check
        %p439 = pneg %p438
      $region46: #{tpu_custom_call.1} parent=5 // pred_check_branch
        %441 = sbr.rel (%p439) target = $region48
      $region47: #{tpu_custom_call.1} parent=5 // pred_region
        %s442 = ssub.s32 %s15, 2
        // Predicated region
        $region49: #{tpu_custom_call.1} parent=47 // pred_check
          %p443 = pneg %p154
        $region50: #{tpu_custom_call.1} parent=47 // pred_check_branch
          %445 = sbr.rel (%p443) target = $region52
        $region51: #{tpu_custom_call.1} parent=47 // pred_region
          %s446 = sand.u32 %s139, 1
          %s447 = scalar_lea.sflag [#allocation4], %s446
          %s448 = sand.u32 %s139, 1
          %s449 = smul.addr %s448, 4
          %s450 = scalar_lea.vmem [#allocation5], %s449
          %451 = dma.done %s447, 64
        $region52: #{tpu_custom_call.1} parent=47 // pred_fallthru
          _
      $region48: #{tpu_custom_call.1} parent=5 // pred_fallthru
        _
    $region6: #{tpu_custom_call.1} parent=1 // loop_footer
      %s19 = sadd.s32 1, %s15
    $region7: #{tpu_custom_call.1} parent=1 // loop_footer_branch
      %14 = sbr.rel target = $region3
    $region8: #{tpu_custom_call.1} parent=1 // loop_exit
      _
    %452 = vsyncpa [#allocation3], 1
    %s453 = scalar_lea.sflag [#allocation3], 1
    %454 = vsyncpa %s453, 1
    %455 = vsyncpa [#allocation4], 1
    %s456 = scalar_lea.sflag [#allocation4], 1
    %457 = vsyncpa %s456, 1

</llo_original>
